<compile_context>
chip_gen: v6e
topology: v6e:2x2x1
jax: 0.10.0
libtpu: 0.0.40
codegen_flags: <defaults>
</compile_context>

<pallas_src>
import functools

import jax
import jax.numpy as jnp
from jax.experimental import pallas as pl
from jax.experimental.pallas import tpu as pltpu

LANES = 128              # batch laid out across lanes (last dim of every block)
HID1 = 6
HID2 = 4
DEFAULT_TILE_ROWS = 4096  # 4096x128 f32 = 2 MiB/block; in+out double-buffered = 8 MiB
MAX_TILE_ROWS = 8192      # keep double-buffered x+out <= 16 MiB (v7x/v5e-safe)


def _round_up(n, m):
    return ((n + m - 1) // m) * m


def _default_compute_dtype():
    """bf16 math on bf16-native VALUs (v6e / v7x); f32 elsewhere (v5e & older)."""
    try:
        kind = jax.devices()[0].device_kind.lower()
    except Exception:
        return jnp.float32
    return jnp.bfloat16 if ("v6" in kind or "v7" in kind) else jnp.float32


def _choose_tile_rows(rows, requested):
    """Pick the sublane-tile size for the 1-D row grid.

    * multiple of 8 (sublane granularity), capped so double-buffered in+out
      blocks stay inside the default scoped-VMEM budget;
    * at most ~half the rows so the "parallel" grid has >= 2 steps and both
      v7x TensorCores get work (megacore sharding is a no-op on a 1-step grid).
    """
    if rows <= 8:
        return rows                       # single full-extent block (tiny input)
    requested = max(8, _round_up(min(requested, MAX_TILE_ROWS), 8))
    half = _round_up(pl.cdiv(rows, 2), 8)
    return min(requested, half)


def _tiny_mlp_kernel(x_ref, w1_ref, b1_ref, w2_ref, b2_ref, w3_ref, b3_ref,
                     o_ref, *, compute_dtype):
    """Fused relu6(x*W1+b1) -> relu6(.@W2+b2) -> .@W3+b3, pure VPU elementwise.

    x_ref / o_ref: (tile_rows, 128) f32 VMEM tiles (batch across sublanes+lanes).
    Weight refs are tiny 1-D f32 SMEM arrays read as scalars (scalar->vreg
    broadcast is cheap).  fc1 and fc2 are interleaved so only ~6 block-sized
    temporaries (x, one h1 unit, four fc2 accumulators) are ever live.
    """
    cdt = compute_dtype
    x = x_ref[...].astype(cdt)

    def sc(ref, i):                       # scalar weight from SMEM, in compute dtype
        return ref[i].astype(cdt)

    # fc2 accumulators start at their bias; fold each h1 unit in as it is made.
    acc = [sc(b2_ref, k) for k in range(HID2)]
    for j in range(HID1):
        h1j = jnp.clip(x * sc(w1_ref, j) + sc(b1_ref, j), 0.0, 6.0)   # fc1 + ReLU6
        for k in range(HID2):
            acc[k] = acc[k] + h1j * sc(w2_ref, j * HID2 + k)          # fc2 FMA

    # fc2 ReLU6 + fc3 weighted sum (no activation).
    y = sc(b3_ref, 0)
    for k in range(HID2):
        y = y + jnp.clip(acc[k], 0.0, 6.0) * sc(w3_ref, k)
    o_ref[...] = y.astype(o_ref.dtype)


def tiny_model_forward_lane_dense(x_lane, params, *, tile_rows=DEFAULT_TILE_ROWS,
                                  compute_dtype=None):
    """Core kernel on a lane-dense (rows, 128) f32 batch; returns the same layout.

    Callers that can keep this layout avoid the (B,1)<->(rows,128) HBM passes.
    """
    w1, b1, w2, b2, w3, b3 = params
    if compute_dtype is None:
        compute_dtype = _default_compute_dtype()

    rows = x_lane.shape[0]
    tile = _choose_tile_rows(rows, tile_rows)
    grid = (pl.cdiv(rows, tile),)          # ragged last block handled by the pipeline

    # Flatten tiny weights for scalar SMEM access (w stored (in, out) row-major).
    w1f, w2f, w3f = jnp.ravel(w1), jnp.ravel(w2), jnp.ravel(w3)   # (6,), (24,), (4,)
    b1f, b2f, b3f = jnp.ravel(b1), jnp.ravel(b2), jnp.ravel(b3)   # (6,), (4,),  (1,)

    smem = pl.BlockSpec(memory_space=pltpu.MemorySpace.SMEM)
    n_elems = rows * LANES
    cost = pl.CostEstimate(
        flops=n_elems * 2 * (HID1 + HID1 * HID2 + HID2 + HID1 + HID2),
        transcendentals=0,
        bytes_accessed=n_elems * 4 * 2
        + 4 * (2 * HID1 + HID1 * HID2 + 2 * HID2 + 1),
    )

    kernel = functools.partial(_tiny_mlp_kernel, compute_dtype=compute_dtype)
    return pl.pallas_call(
        kernel,
        out_shape=jax.ShapeDtypeStruct((rows, LANES), jnp.float32),
        grid=grid,
        in_specs=[
            pl.BlockSpec((tile, LANES), lambda i: (i, 0)),   # x tile (VMEM)
            smem,  # w1 (6,)
            smem,  # b1 (6,)
            smem,  # w2 (24,)  index j*HID2 + k
            smem,  # b2 (4,)
            smem,  # w3 (4,)
            smem,  # b3 (1,)
        ],
        out_specs=pl.BlockSpec((tile, LANES), lambda i: (i, 0)),
        compiler_params=pltpu.CompilerParams(
            dimension_semantics=("parallel",),
            # Let XLA fuse the wrapper-side pad/reshape into the x operand so it
            # does not cost a separate HBM read+write pass.
            allow_input_fusion=[True, False, False, False, False, False, False],
        ),
        cost_estimate=cost,
    )(x_lane, w1f, b1f, w2f, b2f, w3f, b3f)


def tiny_model_forward(x, params, *, tile_rows=DEFAULT_TILE_ROWS, compute_dtype=None):
    """x: (B, 1) float32 -> (B, 1) float32 (same semantics as the PyTorch module)."""
    B = x.shape[0]
    rows = pl.cdiv(B, LANES)
    b_pad = rows * LANES
    x_lane = jnp.pad(jnp.ravel(x), (0, b_pad - B)).reshape(rows, LANES)
    out_lane = tiny_model_forward_lane_dense(
        x_lane, params, tile_rows=tile_rows, compute_dtype=compute_dtype)
    return out_lane.reshape(-1)[:B].reshape(B, 1)


def init_params(key):
    """Uniform +/- 1/sqrt(fan_in), matching PyTorch nn.Linear defaults.

    Weights are stored as (in_features, out_features) so reference does x @ W.
    """
    dims = [(1, HID1), (HID1, HID2), (HID2, 1)]
    params = []
    for fan_in, fan_out in dims:
        kw, kb, key = jax.random.split(key, 3)
        bound = 1.0 / jnp.sqrt(float(fan_in))
        w = jax.random.uniform(kw, (fan_in, fan_out), jnp.float32, -bound, bound)
        b = jax.random.uniform(kb, (fan_out,), jnp.float32, -bound, bound)
        params.extend([w, b])
    return tuple(params)


def reference_forward(x, params):
    """Pure-JAX reference for correctness checking."""
    w1, b1, w2, b2, w3, b3 = params
    h1 = jnp.clip(x @ w1 + b1, 0.0, 6.0)
    h2 = jnp.clip(h1 @ w2 + b2, 0.0, 6.0)
    return h2 @ w3 + b3


if __name__ == "__main__":
    key = jax.random.PRNGKey(0)
    pkey, xkey = jax.random.split(key)
    params = init_params(pkey)

    # Always validate the f32 path tightly; additionally exercise the bf16 fast
    # path (with precision-appropriate tolerance) when on a bf16-VALU chip.
    configs = [(jnp.float32, 1e-5, 1e-5)]
    if _default_compute_dtype() == jnp.bfloat16:
        configs.append((jnp.bfloat16, 1.5e-1, 5e-2))

    # Batch sizes exercising: tiny single block, tail padding inside a block,
    # a full (8,128)-aligned block, a ragged last block, and a >=2-step grid.
    for batch in (8, 200, 1000, 1234, 5000):
        xkey, sub = jax.random.split(xkey)
        x = jax.random.normal(sub, (batch, 1), jnp.float32)
        ref = reference_forward(x, params)
        for cdt, atol, rtol in configs:
            out = jax.block_until_ready(
                tiny_model_forward(x, params, compute_dtype=cdt))
            assert out.shape == (batch, 1), out.shape
            assert jnp.allclose(out, ref, atol=atol, rtol=rtol), (
                str(cdt), batch, float(jnp.max(jnp.abs(out - ref))))

    print("KERNEL_OK")
</pallas_src>

<mosaic_0001>
module attributes {stable_mosaic.version = 11 : i64} {
  func.func @_tiny_mlp_kernel(%arg0: i32, %arg1: memref<1x128xf32, #tpu.memory_space<vmem>>, %arg2: memref<6xf32, #tpu.memory_space<smem>>, %arg3: memref<6xf32, #tpu.memory_space<smem>>, %arg4: memref<24xf32, #tpu.memory_space<smem>>, %arg5: memref<4xf32, #tpu.memory_space<smem>>, %arg6: memref<4xf32, #tpu.memory_space<smem>>, %arg7: memref<1xf32, #tpu.memory_space<smem>>, %arg8: memref<1x128xf32, #tpu.memory_space<vmem>>) attributes {dimension_semantics = [#tpu.dimension_semantics<parallel>], iteration_bounds = array<i64: 1>, scalar_prefetch = 0 : i64, scratch_operands = 0 : i64, tpu.core_type = #tpu.core_type<tc>, window_params = [{transform_indices = @transform_0, window_bounds = array<i64: 1, 128>}, {transform_indices = @transform_1, window_bounds = array<i64: 6>}, {transform_indices = @transform_2, window_bounds = array<i64: 6>}, {transform_indices = @transform_3, window_bounds = array<i64: 24>}, {transform_indices = @transform_4, window_bounds = array<i64: 4>}, {transform_indices = @transform_5, window_bounds = array<i64: 4>}, {transform_indices = @transform_6, window_bounds = array<i64: 1>}, {transform_indices = @transform_7, window_bounds = array<i64: 1, 128>}]} {
    %c0 = arith.constant 0 : index
    %c0_0 = arith.constant 0 : index
    %0 = vector.load %arg1[%c0, %c0_0] : memref<1x128xf32, #tpu.memory_space<vmem>>, vector<1x128xf32>
    %c0_1 = arith.constant 0 : index
    %1 = memref.load %arg5[%c0_1] : memref<4xf32, #tpu.memory_space<smem>>
    %c1 = arith.constant 1 : index
    %2 = memref.load %arg5[%c1] : memref<4xf32, #tpu.memory_space<smem>>
    %c2 = arith.constant 2 : index
    %3 = memref.load %arg5[%c2] : memref<4xf32, #tpu.memory_space<smem>>
    %c3 = arith.constant 3 : index
    %4 = memref.load %arg5[%c3] : memref<4xf32, #tpu.memory_space<smem>>
    %c0_2 = arith.constant 0 : index
    %5 = memref.load %arg2[%c0_2] : memref<6xf32, #tpu.memory_space<smem>>
    %6 = vector.broadcast %5 : f32 to vector<1x128xf32>
    %7 = arith.mulf %0, %6 : vector<1x128xf32>
    %c0_3 = arith.constant 0 : index
    %8 = memref.load %arg3[%c0_3] : memref<6xf32, #tpu.memory_space<smem>>
    %9 = vector.broadcast %8 : f32 to vector<1x128xf32>
    %10 = arith.addf %7, %9 : vector<1x128xf32>
    %cst = arith.constant 0.000000e+00 : f32
    %cst_4 = arith.constant 6.000000e+00 : f32
    %11 = vector.broadcast %cst : f32 to vector<1x128xf32>
    %12 = arith.maximumf %11, %10 : vector<1x128xf32>
    %13 = vector.broadcast %cst_4 : f32 to vector<1x128xf32>
    %14 = arith.minimumf %13, %12 : vector<1x128xf32>
    %c0_5 = arith.constant 0 : index
    %15 = memref.load %arg4[%c0_5] : memref<24xf32, #tpu.memory_space<smem>>
    %16 = vector.broadcast %15 : f32 to vector<1x128xf32>
    %17 = arith.mulf %14, %16 : vector<1x128xf32>
    %18 = vector.broadcast %1 : f32 to vector<1x128xf32>
    %19 = arith.addf %18, %17 : vector<1x128xf32>
    %c1_6 = arith.constant 1 : index
    %20 = memref.load %arg4[%c1_6] : memref<24xf32, #tpu.memory_space<smem>>
    %21 = vector.broadcast %20 : f32 to vector<1x128xf32>
    %22 = arith.mulf %14, %21 : vector<1x128xf32>
    %23 = vector.broadcast %2 : f32 to vector<1x128xf32>
    %24 = arith.addf %23, %22 : vector<1x128xf32>
    %c2_7 = arith.constant 2 : index
    %25 = memref.load %arg4[%c2_7] : memref<24xf32, #tpu.memory_space<smem>>
    %26 = vector.broadcast %25 : f32 to vector<1x128xf32>
    %27 = arith.mulf %14, %26 : vector<1x128xf32>
    %28 = vector.broadcast %3 : f32 to vector<1x128xf32>
    %29 = arith.addf %28, %27 : vector<1x128xf32>
    %c3_8 = arith.constant 3 : index
    %30 = memref.load %arg4[%c3_8] : memref<24xf32, #tpu.memory_space<smem>>
    %31 = vector.broadcast %30 : f32 to vector<1x128xf32>
    %32 = arith.mulf %14, %31 : vector<1x128xf32>
    %33 = vector.broadcast %4 : f32 to vector<1x128xf32>
    %34 = arith.addf %33, %32 : vector<1x128xf32>
    %c1_9 = arith.constant 1 : index
    %35 = memref.load %arg2[%c1_9] : memref<6xf32, #tpu.memory_space<smem>>
    %36 = vector.broadcast %35 : f32 to vector<1x128xf32>
    %37 = arith.mulf %0, %36 : vector<1x128xf32>
    %c1_10 = arith.constant 1 : index
    %38 = memref.load %arg3[%c1_10] : memref<6xf32, #tpu.memory_space<smem>>
    %39 = vector.broadcast %38 : f32 to vector<1x128xf32>
    %40 = arith.addf %37, %39 : vector<1x128xf32>
    %cst_11 = arith.constant 0.000000e+00 : f32
    %cst_12 = arith.constant 6.000000e+00 : f32
    %41 = vector.broadcast %cst_11 : f32 to vector<1x128xf32>
    %42 = arith.maximumf %41, %40 : vector<1x128xf32>
    %43 = vector.broadcast %cst_12 : f32 to vector<1x128xf32>
    %44 = arith.minimumf %43, %42 : vector<1x128xf32>
    %c4 = arith.constant 4 : index
    %45 = memref.load %arg4[%c4] : memref<24xf32, #tpu.memory_space<smem>>
    %46 = vector.broadcast %45 : f32 to vector<1x128xf32>
    %47 = arith.mulf %44, %46 : vector<1x128xf32>
    %48 = arith.addf %19, %47 : vector<1x128xf32>
    %c5 = arith.constant 5 : index
    %49 = memref.load %arg4[%c5] : memref<24xf32, #tpu.memory_space<smem>>
    %50 = vector.broadcast %49 : f32 to vector<1x128xf32>
    %51 = arith.mulf %44, %50 : vector<1x128xf32>
    %52 = arith.addf %24, %51 : vector<1x128xf32>
    %c6 = arith.constant 6 : index
    %53 = memref.load %arg4[%c6] : memref<24xf32, #tpu.memory_space<smem>>
    %54 = vector.broadcast %53 : f32 to vector<1x128xf32>
    %55 = arith.mulf %44, %54 : vector<1x128xf32>
    %56 = arith.addf %29, %55 : vector<1x128xf32>
    %c7 = arith.constant 7 : index
    %57 = memref.load %arg4[%c7] : memref<24xf32, #tpu.memory_space<smem>>
    %58 = vector.broadcast %57 : f32 to vector<1x128xf32>
    %59 = arith.mulf %44, %58 : vector<1x128xf32>
    %60 = arith.addf %34, %59 : vector<1x128xf32>
    %c2_13 = arith.constant 2 : index
    %61 = memref.load %arg2[%c2_13] : memref<6xf32, #tpu.memory_space<smem>>
    %62 = vector.broadcast %61 : f32 to vector<1x128xf32>
    %63 = arith.mulf %0, %62 : vector<1x128xf32>
    %c2_14 = arith.constant 2 : index
    %64 = memref.load %arg3[%c2_14] : memref<6xf32, #tpu.memory_space<smem>>
    %65 = vector.broadcast %64 : f32 to vector<1x128xf32>
    %66 = arith.addf %63, %65 : vector<1x128xf32>
    %cst_15 = arith.constant 0.000000e+00 : f32
    %cst_16 = arith.constant 6.000000e+00 : f32
    %67 = vector.broadcast %cst_15 : f32 to vector<1x128xf32>
    %68 = arith.maximumf %67, %66 : vector<1x128xf32>
    %69 = vector.broadcast %cst_16 : f32 to vector<1x128xf32>
    %70 = arith.minimumf %69, %68 : vector<1x128xf32>
    %c8 = arith.constant 8 : index
    %71 = memref.load %arg4[%c8] : memref<24xf32, #tpu.memory_space<smem>>
    %72 = vector.broadcast %71 : f32 to vector<1x128xf32>
    %73 = arith.mulf %70, %72 : vector<1x128xf32>
    %74 = arith.addf %48, %73 : vector<1x128xf32>
    %c9 = arith.constant 9 : index
    %75 = memref.load %arg4[%c9] : memref<24xf32, #tpu.memory_space<smem>>
    %76 = vector.broadcast %75 : f32 to vector<1x128xf32>
    %77 = arith.mulf %70, %76 : vector<1x128xf32>
    %78 = arith.addf %52, %77 : vector<1x128xf32>
    %c10 = arith.constant 10 : index
    %79 = memref.load %arg4[%c10] : memref<24xf32, #tpu.memory_space<smem>>
    %80 = vector.broadcast %79 : f32 to vector<1x128xf32>
    %81 = arith.mulf %70, %80 : vector<1x128xf32>
    %82 = arith.addf %56, %81 : vector<1x128xf32>
    %c11 = arith.constant 11 : index
    %83 = memref.load %arg4[%c11] : memref<24xf32, #tpu.memory_space<smem>>
    %84 = vector.broadcast %83 : f32 to vector<1x128xf32>
    %85 = arith.mulf %70, %84 : vector<1x128xf32>
    %86 = arith.addf %60, %85 : vector<1x128xf32>
    %c3_17 = arith.constant 3 : index
    %87 = memref.load %arg2[%c3_17] : memref<6xf32, #tpu.memory_space<smem>>
    %88 = vector.broadcast %87 : f32 to vector<1x128xf32>
    %89 = arith.mulf %0, %88 : vector<1x128xf32>
    %c3_18 = arith.constant 3 : index
    %90 = memref.load %arg3[%c3_18] : memref<6xf32, #tpu.memory_space<smem>>
    %91 = vector.broadcast %90 : f32 to vector<1x128xf32>
    %92 = arith.addf %89, %91 : vector<1x128xf32>
    %cst_19 = arith.constant 0.000000e+00 : f32
    %cst_20 = arith.constant 6.000000e+00 : f32
    %93 = vector.broadcast %cst_19 : f32 to vector<1x128xf32>
    %94 = arith.maximumf %93, %92 : vector<1x128xf32>
    %95 = vector.broadcast %cst_20 : f32 to vector<1x128xf32>
    %96 = arith.minimumf %95, %94 : vector<1x128xf32>
    %c12 = arith.constant 12 : index
    %97 = memref.load %arg4[%c12] : memref<24xf32, #tpu.memory_space<smem>>
    %98 = vector.broadcast %97 : f32 to vector<1x128xf32>
    %99 = arith.mulf %96, %98 : vector<1x128xf32>
    %100 = arith.addf %74, %99 : vector<1x128xf32>
    %c13 = arith.constant 13 : index
    %101 = memref.load %arg4[%c13] : memref<24xf32, #tpu.memory_space<smem>>
    %102 = vector.broadcast %101 : f32 to vector<1x128xf32>
    %103 = arith.mulf %96, %102 : vector<1x128xf32>
    %104 = arith.addf %78, %103 : vector<1x128xf32>
    %c14 = arith.constant 14 : index
    %105 = memref.load %arg4[%c14] : memref<24xf32, #tpu.memory_space<smem>>
    %106 = vector.broadcast %105 : f32 to vector<1x128xf32>
    %107 = arith.mulf %96, %106 : vector<1x128xf32>
    %108 = arith.addf %82, %107 : vector<1x128xf32>
    %c15 = arith.constant 15 : index
    %109 = memref.load %arg4[%c15] : memref<24xf32, #tpu.memory_space<smem>>
    %110 = vector.broadcast %109 : f32 to vector<1x128xf32>
    %111 = arith.mulf %96, %110 : vector<1x128xf32>
    %112 = arith.addf %86, %111 : vector<1x128xf32>
    %c4_21 = arith.constant 4 : index
    %113 = memref.load %arg2[%c4_21] : memref<6xf32, #tpu.memory_space<smem>>
    %114 = vector.broadcast %113 : f32 to vector<1x128xf32>
    %115 = arith.mulf %0, %114 : vector<1x128xf32>
    %c4_22 = arith.constant 4 : index
    %116 = memref.load %arg3[%c4_22] : memref<6xf32, #tpu.memory_space<smem>>
    %117 = vector.broadcast %116 : f32 to vector<1x128xf32>
    %118 = arith.addf %115, %117 : vector<1x128xf32>
    %cst_23 = arith.constant 0.000000e+00 : f32
    %cst_24 = arith.constant 6.000000e+00 : f32
    %119 = vector.broadcast %cst_23 : f32 to vector<1x128xf32>
    %120 = arith.maximumf %119, %118 : vector<1x128xf32>
    %121 = vector.broadcast %cst_24 : f32 to vector<1x128xf32>
    %122 = arith.minimumf %121, %120 : vector<1x128xf32>
    %c16 = arith.constant 16 : index
    %123 = memref.load %arg4[%c16] : memref<24xf32, #tpu.memory_space<smem>>
    %124 = vector.broadcast %123 : f32 to vector<1x128xf32>
    %125 = arith.mulf %122, %124 : vector<1x128xf32>
    %126 = arith.addf %100, %125 : vector<1x128xf32>
    %c17 = arith.constant 17 : index
    %127 = memref.load %arg4[%c17] : memref<24xf32, #tpu.memory_space<smem>>
    %128 = vector.broadcast %127 : f32 to vector<1x128xf32>
    %129 = arith.mulf %122, %128 : vector<1x128xf32>
    %130 = arith.addf %104, %129 : vector<1x128xf32>
    %c18 = arith.constant 18 : index
    %131 = memref.load %arg4[%c18] : memref<24xf32, #tpu.memory_space<smem>>
    %132 = vector.broadcast %131 : f32 to vector<1x128xf32>
    %133 = arith.mulf %122, %132 : vector<1x128xf32>
    %134 = arith.addf %108, %133 : vector<1x128xf32>
    %c19 = arith.constant 19 : index
    %135 = memref.load %arg4[%c19] : memref<24xf32, #tpu.memory_space<smem>>
    %136 = vector.broadcast %135 : f32 to vector<1x128xf32>
    %137 = arith.mulf %122, %136 : vector<1x128xf32>
    %138 = arith.addf %112, %137 : vector<1x128xf32>
    %c5_25 = arith.constant 5 : index
    %139 = memref.load %arg2[%c5_25] : memref<6xf32, #tpu.memory_space<smem>>
    %140 = vector.broadcast %139 : f32 to vector<1x128xf32>
    %141 = arith.mulf %0, %140 : vector<1x128xf32>
    %c5_26 = arith.constant 5 : index
    %142 = memref.load %arg3[%c5_26] : memref<6xf32, #tpu.memory_space<smem>>
    %143 = vector.broadcast %142 : f32 to vector<1x128xf32>
    %144 = arith.addf %141, %143 : vector<1x128xf32>
    %cst_27 = arith.constant 0.000000e+00 : f32
    %cst_28 = arith.constant 6.000000e+00 : f32
    %145 = vector.broadcast %cst_27 : f32 to vector<1x128xf32>
    %146 = arith.maximumf %145, %144 : vector<1x128xf32>
    %147 = vector.broadcast %cst_28 : f32 to vector<1x128xf32>
    %148 = arith.minimumf %147, %146 : vector<1x128xf32>
    %c20 = arith.constant 20 : index
    %149 = memref.load %arg4[%c20] : memref<24xf32, #tpu.memory_space<smem>>
    %150 = vector.broadcast %149 : f32 to vector<1x128xf32>
    %151 = arith.mulf %148, %150 : vector<1x128xf32>
    %152 = arith.addf %126, %151 : vector<1x128xf32>
    %c21 = arith.constant 21 : index
    %153 = memref.load %arg4[%c21] : memref<24xf32, #tpu.memory_space<smem>>
    %154 = vector.broadcast %153 : f32 to vector<1x128xf32>
    %155 = arith.mulf %148, %154 : vector<1x128xf32>
    %156 = arith.addf %130, %155 : vector<1x128xf32>
    %c22 = arith.constant 22 : index
    %157 = memref.load %arg4[%c22] : memref<24xf32, #tpu.memory_space<smem>>
    %158 = vector.broadcast %157 : f32 to vector<1x128xf32>
    %159 = arith.mulf %148, %158 : vector<1x128xf32>
    %160 = arith.addf %134, %159 : vector<1x128xf32>
    %c23 = arith.constant 23 : index
    %161 = memref.load %arg4[%c23] : memref<24xf32, #tpu.memory_space<smem>>
    %162 = vector.broadcast %161 : f32 to vector<1x128xf32>
    %163 = arith.mulf %148, %162 : vector<1x128xf32>
    %164 = arith.addf %138, %163 : vector<1x128xf32>
    %c0_29 = arith.constant 0 : index
    %165 = memref.load %arg7[%c0_29] : memref<1xf32, #tpu.memory_space<smem>>
    %cst_30 = arith.constant 0.000000e+00 : f32
    %cst_31 = arith.constant 6.000000e+00 : f32
    %166 = vector.broadcast %cst_30 : f32 to vector<1x128xf32>
    %167 = arith.maximumf %166, %152 : vector<1x128xf32>
    %168 = vector.broadcast %cst_31 : f32 to vector<1x128xf32>
    %169 = arith.minimumf %168, %167 : vector<1x128xf32>
    %c0_32 = arith.constant 0 : index
    %170 = memref.load %arg6[%c0_32] : memref<4xf32, #tpu.memory_space<smem>>
    %171 = vector.broadcast %170 : f32 to vector<1x128xf32>
    %172 = arith.mulf %169, %171 : vector<1x128xf32>
    %173 = vector.broadcast %165 : f32 to vector<1x128xf32>
    %174 = arith.addf %173, %172 : vector<1x128xf32>
    %cst_33 = arith.constant 0.000000e+00 : f32
    %cst_34 = arith.constant 6.000000e+00 : f32
    %175 = vector.broadcast %cst_33 : f32 to vector<1x128xf32>
    %176 = arith.maximumf %175, %156 : vector<1x128xf32>
    %177 = vector.broadcast %cst_34 : f32 to vector<1x128xf32>
    %178 = arith.minimumf %177, %176 : vector<1x128xf32>
    %c1_35 = arith.constant 1 : index
    %179 = memref.load %arg6[%c1_35] : memref<4xf32, #tpu.memory_space<smem>>
    %180 = vector.broadcast %179 : f32 to vector<1x128xf32>
    %181 = arith.mulf %178, %180 : vector<1x128xf32>
    %182 = arith.addf %174, %181 : vector<1x128xf32>
    %cst_36 = arith.constant 0.000000e+00 : f32
    %cst_37 = arith.constant 6.000000e+00 : f32
    %183 = vector.broadcast %cst_36 : f32 to vector<1x128xf32>
    %184 = arith.maximumf %183, %160 : vector<1x128xf32>
    %185 = vector.broadcast %cst_37 : f32 to vector<1x128xf32>
    %186 = arith.minimumf %185, %184 : vector<1x128xf32>
    %c2_38 = arith.constant 2 : index
    %187 = memref.load %arg6[%c2_38] : memref<4xf32, #tpu.memory_space<smem>>
    %188 = vector.broadcast %187 : f32 to vector<1x128xf32>
    %189 = arith.mulf %186, %188 : vector<1x128xf32>
    %190 = arith.addf %182, %189 : vector<1x128xf32>
    %cst_39 = arith.constant 0.000000e+00 : f32
    %cst_40 = arith.constant 6.000000e+00 : f32
    %191 = vector.broadcast %cst_39 : f32 to vector<1x128xf32>
    %192 = arith.maximumf %191, %164 : vector<1x128xf32>
    %193 = vector.broadcast %cst_40 : f32 to vector<1x128xf32>
    %194 = arith.minimumf %193, %192 : vector<1x128xf32>
    %c3_41 = arith.constant 3 : index
    %195 = memref.load %arg6[%c3_41] : memref<4xf32, #tpu.memory_space<smem>>
    %196 = vector.broadcast %195 : f32 to vector<1x128xf32>
    %197 = arith.mulf %194, %196 : vector<1x128xf32>
    %198 = arith.addf %190, %197 : vector<1x128xf32>
    %c0_42 = arith.constant 0 : index
    %c0_43 = arith.constant 0 : index
    %199 = vector.load %arg8[%c0_42, %c0_43] : memref<1x128xf32, #tpu.memory_space<vmem>>, vector<1x128xf32>
    tpu.vector_store %arg8[%c0_42, %c0_43], %198 {strides = array<i32>} : memref<1x128xf32, #tpu.memory_space<vmem>>, vector<1x128xf32>,
    return
  }
  func.func @transform_0(%arg0: i32) -> (i32, i32) {
    %c0_i32 = arith.constant 0 : i32
    %c0_i32_0 = arith.constant 0 : i32
    return %arg0, %c0_i32 : i32, i32
  }
  func.func @transform_1(%arg0: i32) -> i32 {
    %c0_i32 = arith.constant 0 : i32
    %c0_i32_0 = arith.constant 0 : i32
    return %c0_i32 : i32
  }
  func.func @transform_2(%arg0: i32) -> i32 {
    %c0_i32 = arith.constant 0 : i32
    %c0_i32_0 = arith.constant 0 : i32
    return %c0_i32 : i32
  }
  func.func @transform_3(%arg0: i32) -> i32 {
    %c0_i32 = arith.constant 0 : i32
    %c0_i32_0 = arith.constant 0 : i32
    return %c0_i32 : i32
  }
  func.func @transform_4(%arg0: i32) -> i32 {
    %c0_i32 = arith.constant 0 : i32
    %c0_i32_0 = arith.constant 0 : i32
    return %c0_i32 : i32
  }
  func.func @transform_5(%arg0: i32) -> i32 {
    %c0_i32 = arith.constant 0 : i32
    %c0_i32_0 = arith.constant 0 : i32
    return %c0_i32 : i32
  }
  func.func @transform_6(%arg0: i32) -> i32 {
    %c0_i32 = arith.constant 0 : i32
    %c0_i32_0 = arith.constant 0 : i32
    return %c0_i32 : i32
  }
  func.func @transform_7(%arg0: i32) -> (i32, i32) {
    %c0_i32 = arith.constant 0 : i32
    %c0_i32_0 = arith.constant 0 : i32
    return %arg0, %c0_i32 : i32, i32
  }
}

</mosaic_0001>

<llo_original>
// kernel: tpu_custom_call.1
$region0: #{tpu_custom_call.1}
  #allocation0 [shape = 'u32[]', space=smem, size = 0x4, offset = 0x4, fixed_abs, tag = 'smem constant byte address 0x4 - core index']
  #allocation1 [shape = 'u32[144,128]{1,0:T(1,128)}', space=vmem, size = 0x12000, scoped, tag = 'internal scratch']
  #allocation2 [shape = 'f32[1]{0:T(128)S(6)}', space=smem, size = 0x200, scoped, tag = 'scoped memory for tpu_custom_call.1']
  %s0 = inlined_call_operand.vmem [shape: f32[1,128], index: 0, kind: input, shape index: {}]
  %s1 = inlined_call_operand.vmem [shape: f32[6], index: 1, kind: input, shape index: {}]
  %s2 = inlined_call_operand.vmem [shape: f32[6], index: 2, kind: input, shape index: {}]
  %s3 = inlined_call_operand.vmem [shape: f32[24], index: 3, kind: input, shape index: {}]
  %s4 = inlined_call_operand.vmem [shape: f32[4], index: 4, kind: input, shape index: {}]
  %s5 = inlined_call_operand.vmem [shape: f32[4], index: 5, kind: input, shape index: {}]
  %s6 = inlined_call_operand.<no memory space> [shape: f32[1], index: 6, kind: input, shape index: {}]
  %s7 = inlined_call_operand.hbm [shape: f32[1,128], index: 7, kind: output, shape index: {}]
  %s8 = sld [smem:[#allocation0]]
  $region58: #{tpu_custom_call.1} parent=0
    _
  %s10 = ssub.s32 1, %s8
  %s11 = scalar_select 0, %s10, %s8
  %12 = sst [smem:[#allocation2]] %s6
  $region1: #{tpu_custom_call.1} parent=0
    #allocation3 [shape = 'u8[512]{0}', space=smem, size = 0x200, scoped, tag = 'input window, operand 1, single buffered']
    #allocation4 [shape = 's32[1]{0}', space=sflag, size = 0x4, scoped, tag = 'scoped memory for tpu_custom_call.1']
    #allocation5 [shape = 's32[1]{0}', space=sflag, size = 0x4, scoped, tag = 'scoped memory for tpu_custom_call.1']
    #allocation6 [shape = 'u8[512]{0}', space=smem, size = 0x200, scoped, tag = 'input window, operand 2, single buffered']
    #allocation7 [shape = 's32[1]{0}', space=sflag, size = 0x4, scoped, tag = 'scoped memory for tpu_custom_call.1']
    #allocation8 [shape = 'u8[512]{0}', space=smem, size = 0x200, scoped, tag = 'input window, operand 3, single buffered']
    #allocation9 [shape = 'u8[512]{0}', space=smem, size = 0x200, scoped, tag = 'input window, operand 4, single buffered']
    #allocation10 [shape = 's32[1]{0}', space=sflag, size = 0x4, scoped, tag = 'scoped memory for tpu_custom_call.1']
    #allocation11 [shape = 'u8[512]{0}', space=smem, size = 0x200, scoped, tag = 'input window, operand 5, single buffered']
    #allocation12 [shape = 'u8[512]{0}', space=vmem, size = 0x400, scoped, tag = 'output window, operand 0, single buffered']
    %13 = vsyncpa [#allocation5], 0
    %14 = vsyncpa [#allocation7], 0
    %15 = vsyncpa [#allocation10], 0
    %16 = vsyncpa [#allocation4], 0
    // Predicated region
    $region2: #{tpu_custom_call.1} parent=1 // pred_check
      _
    $region3: #{tpu_custom_call.1} parent=1 // pred_check_branch
      %18 = sbr.rel (0) target = $region5
    $region4: #{tpu_custom_call.1} parent=1 // pred_region
      _
    $region5: #{tpu_custom_call.1} parent=1 // pred_fallthru
      _
    // Predicated region
    $region6: #{tpu_custom_call.1} parent=1 // pred_check
      _
    $region7: #{tpu_custom_call.1} parent=1 // pred_check_branch
      %20 = sbr.rel (0) target = $region9
    $region8: #{tpu_custom_call.1} parent=1 // pred_region
      %s22 = ssub.s32 16, 16
      %23 = vsyncadd [#allocation5], %s22
      %s25 = sshll.u32 %s1, 4
      %s26 = int_to_ptr.vmem [resolvable:$true] %s25
      %28 = dma.vmem_to_smem %s26, 16, [#allocation3], [#allocation5]
    $region9: #{tpu_custom_call.1} parent=1 // pred_fallthru
      _
    // Predicated region
    $region10: #{tpu_custom_call.1} parent=1 // pred_check
      _
    $region11: #{tpu_custom_call.1} parent=1 // pred_check_branch
      %30 = sbr.rel (0) target = $region13
    $region12: #{tpu_custom_call.1} parent=1 // pred_region
      %s32 = ssub.s32 16, 16
      %33 = vsyncadd [#allocation7], %s32
      %s35 = sshll.u32 %s2, 4
      %s36 = int_to_ptr.vmem [resolvable:$true] %s35
      %38 = dma.vmem_to_smem %s36, 16, [#allocation6], [#allocation7]
    $region13: #{tpu_custom_call.1} parent=1 // pred_fallthru
      _
    // Predicated region
    $region14: #{tpu_custom_call.1} parent=1 // pred_check
      _
    $region15: #{tpu_custom_call.1} parent=1 // pred_check_branch
      %40 = sbr.rel (0) target = $region17
    $region16: #{tpu_custom_call.1} parent=1 // pred_region
      %s42 = ssub.s32 16, 16
      %43 = vsyncadd [#allocation7], %s42
      %s45 = sshll.u32 %s3, 4
      %s46 = int_to_ptr.vmem [resolvable:$true] %s45
      %48 = dma.vmem_to_smem %s46, 16, [#allocation8], [#allocation7]
    $region17: #{tpu_custom_call.1} parent=1 // pred_fallthru
      _
    // Predicated region
    $region18: #{tpu_custom_call.1} parent=1 // pred_check
      _
    $region19: #{tpu_custom_call.1} parent=1 // pred_check_branch
      %50 = sbr.rel (0) target = $region21
    $region20: #{tpu_custom_call.1} parent=1 // pred_region
      %s52 = ssub.s32 16, 16
      %53 = vsyncadd [#allocation10], %s52
      %s55 = sshll.u32 %s4, 4
      %s56 = int_to_ptr.vmem [resolvable:$true] %s55
      %58 = dma.vmem_to_smem %s56, 16, [#allocation9], [#allocation10]
    $region21: #{tpu_custom_call.1} parent=1 // pred_fallthru
      _
    // Predicated region
    $region22: #{tpu_custom_call.1} parent=1 // pred_check
      _
    $region23: #{tpu_custom_call.1} parent=1 // pred_check_branch
      %60 = sbr.rel (0) target = $region25
    $region24: #{tpu_custom_call.1} parent=1 // pred_region
      %s62 = ssub.s32 16, 16
      %63 = vsyncadd [#allocation10], %s62
      %s65 = sshll.u32 %s5, 4
      %s66 = int_to_ptr.vmem [resolvable:$true] %s65
      %68 = dma.vmem_to_smem %s66, 16, [#allocation11], [#allocation10]
    $region25: #{tpu_custom_call.1} parent=1 // pred_fallthru
      _
    // Predicated region
    $region26: #{tpu_custom_call.1} parent=1 // pred_check
      _
    $region27: #{tpu_custom_call.1} parent=1 // pred_check_branch
      %70 = sbr.rel (0) target = $region29
    $region28: #{tpu_custom_call.1} parent=1 // pred_region
      _
    $region29: #{tpu_custom_call.1} parent=1 // pred_fallthru
      _
    // Predicated region
    $region30: #{tpu_custom_call.1} parent=1 // pred_check
      _
    $region31: #{tpu_custom_call.1} parent=1 // pred_check_branch
      %72 = sbr.rel (0) target = $region33
    $region32: #{tpu_custom_call.1} parent=1 // pred_region
      %73 = dma.done [#allocation5], 16
    $region33: #{tpu_custom_call.1} parent=1 // pred_fallthru
      _
    // Predicated region
    $region34: #{tpu_custom_call.1} parent=1 // pred_check
      _
    $region35: #{tpu_custom_call.1} parent=1 // pred_check_branch
      %75 = sbr.rel (0) target = $region37
    $region36: #{tpu_custom_call.1} parent=1 // pred_region
      %76 = dma.done [#allocation7], 16
    $region37: #{tpu_custom_call.1} parent=1 // pred_fallthru
      _
    // Predicated region
    $region38: #{tpu_custom_call.1} parent=1 // pred_check
      _
    $region39: #{tpu_custom_call.1} parent=1 // pred_check_branch
      %78 = sbr.rel (0) target = $region41
    $region40: #{tpu_custom_call.1} parent=1 // pred_region
      %79 = dma.done [#allocation7], 16
    $region41: #{tpu_custom_call.1} parent=1 // pred_fallthru
      _
    // Predicated region
    $region42: #{tpu_custom_call.1} parent=1 // pred_check
      _
    $region43: #{tpu_custom_call.1} parent=1 // pred_check_branch
      %81 = sbr.rel (0) target = $region45
    $region44: #{tpu_custom_call.1} parent=1 // pred_region
      %82 = dma.done [#allocation10], 16
    $region45: #{tpu_custom_call.1} parent=1 // pred_fallthru
      _
    // Predicated region
    $region46: #{tpu_custom_call.1} parent=1 // pred_check
      _
    $region47: #{tpu_custom_call.1} parent=1 // pred_check_branch
      %84 = sbr.rel (0) target = $region49
    $region48: #{tpu_custom_call.1} parent=1 // pred_region
      %85 = dma.done [#allocation10], 16
    $region49: #{tpu_custom_call.1} parent=1 // pred_fallthru
      _
    %86 = sfence
    %v87 = vld [vmem:[%s0] sm:$0x1]
    %s88 = sld [smem:[#allocation9]]
    %s89 = sld [smem:[#allocation9 + $0x1]]
    %s90 = sld [smem:[#allocation9 + $0x2]]
    %s91 = sld [smem:[#allocation9 + $0x3]]
    %s92 = sld [smem:[#allocation3]]
    %v93 = vstv %s92
    %v94 = vmul.f32 %v87, %v93
    %s95 = sld [smem:[#allocation6]]
    %v96 = vstv %s95
    %v97 = vadd.f32 %v94, %v96
    %v98 = vmax.f32 %v97, 0.0
    %v99 = vmin.f32 %v98, 6.0
    %s100 = sld [smem:[#allocation8]]
    %v101 = vstv %s100
    %v102 = vmul.f32 %v99, %v101
    %v103 = vstv %s88
    %v104 = vadd.f32 %v103, %v102
    %s105 = sld [smem:[#allocation8 + $0x1]]
    %v106 = vstv %s105
    %v107 = vmul.f32 %v99, %v106
    %v108 = vstv %s89
    %v109 = vadd.f32 %v108, %v107
    %s110 = sld [smem:[#allocation8 + $0x2]]
    %v111 = vstv %s110
    %v112 = vmul.f32 %v99, %v111
    %v113 = vstv %s90
    %v114 = vadd.f32 %v113, %v112
    %s115 = sld [smem:[#allocation8 + $0x3]]
    %v116 = vstv %s115
    %v117 = vmul.f32 %v99, %v116
    %v118 = vstv %s91
    %v119 = vadd.f32 %v118, %v117
    %s120 = sld [smem:[#allocation3 + $0x1]]
    %v121 = vstv %s120
    %v122 = vmul.f32 %v87, %v121
    %s123 = sld [smem:[#allocation6 + $0x1]]
    %v124 = vstv %s123
    %v125 = vadd.f32 %v122, %v124
    %v126 = vmax.f32 %v125, 0.0
    %v127 = vmin.f32 %v126, 6.0
    %s128 = sld [smem:[#allocation8 + $0x4]]
    %v129 = vstv %s128
    %v130 = vmul.f32 %v127, %v129
    %v131 = vadd.f32 %v104, %v130
    %s132 = sld [smem:[#allocation8 + $0x5]]
    %v133 = vstv %s132
    %v134 = vmul.f32 %v127, %v133
    %v135 = vadd.f32 %v109, %v134
    %s136 = sld [smem:[#allocation8 + $0x6]]
    %v137 = vstv %s136
    %v138 = vmul.f32 %v127, %v137
    %v139 = vadd.f32 %v114, %v138
    %s140 = sld [smem:[#allocation8 + $0x7]]
    %v141 = vstv %s140
    %v142 = vmul.f32 %v127, %v141
    %v143 = vadd.f32 %v119, %v142
    %s144 = sld [smem:[#allocation3 + $0x2]]
    %v145 = vstv %s144
    %v146 = vmul.f32 %v87, %v145
    %s147 = sld [smem:[#allocation6 + $0x2]]
    %v148 = vstv %s147
    %v149 = vadd.f32 %v146, %v148
    %v150 = vmax.f32 %v149, 0.0
    %v151 = vmin.f32 %v150, 6.0
    %s152 = sld [smem:[#allocation8 + $0x8]]
    %v153 = vstv %s152
    %v154 = vmul.f32 %v151, %v153
    %v155 = vadd.f32 %v131, %v154
    %s156 = sld [smem:[#allocation8 + $0x9]]
    %v157 = vstv %s156
    %v158 = vmul.f32 %v151, %v157
    %v159 = vadd.f32 %v135, %v158
    %s160 = sld [smem:[#allocation8 + $0xa]]
    %v161 = vstv %s160
    %v162 = vmul.f32 %v151, %v161
    %v163 = vadd.f32 %v139, %v162
    %s164 = sld [smem:[#allocation8 + $0xb]]
    %v165 = vstv %s164
    %v166 = vmul.f32 %v151, %v165
    %v167 = vadd.f32 %v143, %v166
    %s168 = sld [smem:[#allocation3 + $0x3]]
    %v169 = vstv %s168
    %v170 = vmul.f32 %v87, %v169
    %s171 = sld [smem:[#allocation6 + $0x3]]
    %v172 = vstv %s171
    %v173 = vadd.f32 %v170, %v172
    %v174 = vmax.f32 %v173, 0.0
    %v175 = vmin.f32 %v174, 6.0
    %s176 = sld [smem:[#allocation8 + $0xc]]
    %v177 = vstv %s176
    %v178 = vmul.f32 %v175, %v177
    %v179 = vadd.f32 %v155, %v178
    %s180 = sld [smem:[#allocation8 + $0xd]]
    %v181 = vstv %s180
    %v182 = vmul.f32 %v175, %v181
    %v183 = vadd.f32 %v159, %v182
    %s184 = sld [smem:[#allocation8 + $0xe]]
    %v185 = vstv %s184
    %v186 = vmul.f32 %v175, %v185
    %v187 = vadd.f32 %v163, %v186
    %s188 = sld [smem:[#allocation8 + $0xf]]
    %v189 = vstv %s188
    %v190 = vmul.f32 %v175, %v189
    %v191 = vadd.f32 %v167, %v190
    %s192 = sld [smem:[#allocation3 + $0x4]]
    %v193 = vstv %s192
    %v194 = vmul.f32 %v87, %v193
    %s195 = sld [smem:[#allocation6 + $0x4]]
    %v196 = vstv %s195
    %v197 = vadd.f32 %v194, %v196
    %v198 = vmax.f32 %v197, 0.0
    %v199 = vmin.f32 %v198, 6.0
    %s200 = sld [smem:[#allocation8 + $0x10]]
    %v201 = vstv %s200
    %v202 = vmul.f32 %v199, %v201
    %v203 = vadd.f32 %v179, %v202
    %s204 = sld [smem:[#allocation8 + $0x11]]
    %v205 = vstv %s204
    %v206 = vmul.f32 %v199, %v205
    %v207 = vadd.f32 %v183, %v206
    %s208 = sld [smem:[#allocation8 + $0x12]]
    %v209 = vstv %s208
    %v210 = vmul.f32 %v199, %v209
    %v211 = vadd.f32 %v187, %v210
    %s212 = sld [smem:[#allocation8 + $0x13]]
    %v213 = vstv %s212
    %v214 = vmul.f32 %v199, %v213
    %v215 = vadd.f32 %v191, %v214
    %s216 = sld [smem:[#allocation3 + $0x5]]
    %v217 = vstv %s216
    %v218 = vmul.f32 %v87, %v217
    %s219 = sld [smem:[#allocation6 + $0x5]]
    %v220 = vstv %s219
    %v221 = vadd.f32 %v218, %v220
    %v222 = vmax.f32 %v221, 0.0
    %v223 = vmin.f32 %v222, 6.0
    %s224 = sld [smem:[#allocation8 + $0x14]]
    %v225 = vstv %s224
    %v226 = vmul.f32 %v223, %v225
    %v227 = vadd.f32 %v203, %v226
    %s228 = sld [smem:[#allocation8 + $0x15]]
    %v229 = vstv %s228
    %v230 = vmul.f32 %v223, %v229
    %v231 = vadd.f32 %v207, %v230
    %s232 = sld [smem:[#allocation8 + $0x16]]
    %v233 = vstv %s232
    %v234 = vmul.f32 %v223, %v233
    %v235 = vadd.f32 %v211, %v234
    %s236 = sld [smem:[#allocation8 + $0x17]]
    %v237 = vstv %s236
    %v238 = vmul.f32 %v223, %v237
    %v239 = vadd.f32 %v215, %v238
    %s240 = sld [smem:[#allocation2]]
    %v241 = vmax.f32 %v227, 0.0
    %v242 = vmin.f32 %v241, 6.0
    %s243 = sld [smem:[#allocation11]]
    %v244 = vstv %s243
    %v245 = vmul.f32 %v242, %v244
    %v246 = vstv %s240
    %v247 = vadd.f32 %v246, %v245
    %v248 = vmax.f32 %v231, 0.0
    %v249 = vmin.f32 %v248, 6.0
    %s250 = sld [smem:[#allocation11 + $0x1]]
    %v251 = vstv %s250
    %v252 = vmul.f32 %v249, %v251
    %v253 = vadd.f32 %v247, %v252
    %v254 = vmax.f32 %v235, 0.0
    %v255 = vmin.f32 %v254, 6.0
    %s256 = sld [smem:[#allocation11 + $0x2]]
    %v257 = vstv %s256
    %v258 = vmul.f32 %v255, %v257
    %v259 = vadd.f32 %v253, %v258
    %v260 = vmax.f32 %v239, 0.0
    %v261 = vmin.f32 %v260, 6.0
    %s262 = sld [smem:[#allocation11 + $0x3]]
    %v263 = vstv %s262
    %v264 = vmul.f32 %v261, %v263
    %v265 = vadd.f32 %v259, %v264
    %266 = vst [vmem:[#allocation12] sm:$0x1] %v265
    // Predicated region
    $region50: #{tpu_custom_call.1} parent=1 // pred_check
      _
    $region51: #{tpu_custom_call.1} parent=1 // pred_check_branch
      %268 = sbr.rel (0) target = $region53
    $region52: #{tpu_custom_call.1} parent=1 // pred_region
      %s270 = ssub.s32 16, 16
      %271 = vsyncadd [#allocation4], %s270
      %s273 = sshll.u32 [#allocation12], 4
      %s274 = int_to_ptr.vmem [resolvable:$true] %s273
      %276 = dma.vmem_to_hbm [thread:$0]  %s274, 16, %s7, [#allocation4]
    $region53: #{tpu_custom_call.1} parent=1 // pred_fallthru
      _
    // Predicated region
    $region54: #{tpu_custom_call.1} parent=1 // pred_check
      _
    $region55: #{tpu_custom_call.1} parent=1 // pred_check_branch
      %278 = sbr.rel (0) target = $region57
    $region56: #{tpu_custom_call.1} parent=1 // pred_region
      %279 = dma.done [#allocation4], 16
    $region57: #{tpu_custom_call.1} parent=1 // pred_fallthru
      _
    %280 = vsyncpa [#allocation4], 1
    %281 = vsyncpa [#allocation5], 1
    %282 = vsyncpa [#allocation7], 1
    %283 = vsyncpa [#allocation10], 1

</llo_original>
